<compile_context>
chip_gen: v7x
topology: tpu7x:2x2x1
jax: 0.10.0
libtpu: 0.0.40
codegen_flags: <defaults>
</compile_context>

<pallas_src>
import jax
import jax.numpy as jnp
from jax.experimental import pallas as pl
from jax.experimental.pallas import tpu as pltpu

# ----------------------------- config ---------------------------------------
WIN = 32            # framing window (feature-extractor "kernel size")
HOP = 16            # framing hop (stride); WIN == 2 * HOP is assumed below
SSL_OUT_DIM = 128   # hidden / output feature dim (ssl_out_dim)
ROW_TILE = 1024     # rows (B*F) processed per grid step (tuned constant)
MIN_ROW_TILE = 16   # bf16 sublane packing -> keep row tiles a multiple of 16


def _round_up(x, m):
    return ((x + m - 1) // m) * m


# ----------------------------- Pallas kernel --------------------------------
def ssl_kernel(frames_ref, w_eff_ref, w2_ref, bias_ref, out_ref):
    """Fused synthetic-SSL forward for one row tile (projection folded into W1).

    frames_ref: (TILE, WIN)  bf16   framed waveform rows
    w_eff_ref:  (WIN, D)     bf16   folded weight  Wp @ W1          (resident)
    w2_ref:     (D, D)       bf16   layer-2 (last) weight           (resident)
    bias_ref:   (8, D)       f32    row 0 = b_eff (= bp@W1 + b1), row 1 = b2
    out_ref:    (TILE, D)    bf16   == ssl_features[-1] rows
    """
    b = bias_ref[...]
    b_eff = b[0:1, :]
    b2 = b[1:2, :]

    # folded feature-extractor + layer-1 matmul, f32 MXU accumulation
    h1 = jnp.dot(frames_ref[...], w_eff_ref[...],
                 preferred_element_type=jnp.float32) + b_eff
    # TODO(synk): jax.nn.gelu defaults to the tanh approximation; PyTorch
    # nn.GELU default is exact erf — self-consistent with the in-file reference.
    h1 = jax.nn.gelu(h1)                       # f32 on VPU/EUP (v5e-safe)
    # layer 2 (last hidden state == ssl_features[-1])
    h2 = jnp.dot(h1.astype(jnp.bfloat16), w2_ref[...],
                 preferred_element_type=jnp.float32) + b2
    out_ref[...] = h2.astype(out_ref.dtype)    # bf16 HBM writeback


def _ssl_backbone_pallas(frames_bf16, params):
    """frames_bf16: [R, WIN] bf16. Returns [R, D] bf16 (last hidden state)."""
    R, W = frames_bf16.shape
    D = SSL_OUT_DIM
    w_eff, w2, bias_pack = params

    # Row-tile selection: large tiles for long audio (amortize per-step
    # overhead, fill MXU M dim); for short inputs split into ~2 tiles so both
    # v7x TensorCores get work.
    if R >= 2 * ROW_TILE:
        tile = ROW_TILE
    else:
        tile = max(MIN_ROW_TILE, _round_up(pl.cdiv(R, 2), MIN_ROW_TILE))

    grid = (pl.cdiv(R, tile),)   # ragged last block handled by Pallas (masked)

    out = pl.pallas_call(
        ssl_kernel,
        out_shape=jax.ShapeDtypeStruct((R, D), jnp.bfloat16),
        grid_spec=pltpu.PrefetchScalarGridSpec(
            num_scalar_prefetch=0,
            grid=grid,
            in_specs=[
                pl.BlockSpec((tile, W), lambda i: (i, 0)),  # frames tile
                pl.BlockSpec((W, D), lambda i: (0, 0)),     # W_eff (resident)
                pl.BlockSpec((D, D), lambda i: (0, 0)),     # W2    (resident)
                pl.BlockSpec((8, D), lambda i: (0, 0)),     # packed biases
            ],
            out_specs=pl.BlockSpec((tile, D), lambda i: (i, 0)),
        ),
        compiler_params=pltpu.CompilerParams(
            dimension_semantics=("parallel",)),
    )(frames_bf16, w_eff, w2, bias_pack)

    return out


# ----------------------------- SSL_Model wrapper -----------------------------
def init_params(key):
    """Deterministic synthetic SSL-backbone parameters.

    Folds the projection into layer 1 in f32 before the bf16 cast:
      W_eff = Wp @ W1,  b_eff = bp @ W1 + b1.
    """
    kp, k1, k2, kb = jax.random.split(key, 4)
    D = SSL_OUT_DIM
    wp = jax.random.normal(kp, (WIN, D), jnp.float32) * (1.0 / jnp.sqrt(WIN))
    w1 = jax.random.normal(k1, (D, D), jnp.float32) * (1.0 / jnp.sqrt(D))
    w2 = jax.random.normal(k2, (D, D), jnp.float32) * (1.0 / jnp.sqrt(D))
    b = jax.random.normal(kb, (3, D), jnp.float32) * 0.1
    bp, b1, b2 = b[0:1], b[1:2], b[2:3]

    w_eff = jnp.dot(wp, w1).astype(jnp.bfloat16)          # (WIN, D)
    b_eff = jnp.dot(bp, w1) + b1                          # (1, D) f32
    bias_pack = (jnp.zeros((8, D), jnp.float32)
                 .at[0:1].set(b_eff)
                 .at[1:2].set(b2))
    return (w_eff, w2.astype(jnp.bfloat16), bias_pack)


def _frame_waveform(wav_2d):
    """Gather-free framing: [B, T] -> [B, F, WIN] using WIN == 2 * HOP."""
    B, T = wav_2d.shape
    F = (T - WIN) // HOP + 1
    n_hops = F + 1                                   # (F+1)*HOP <= T always
    hops = wav_2d[:, :n_hops * HOP].reshape(B, n_hops, HOP)   # [B, F+1, HOP]
    frames = jnp.concatenate([hops[:, :-1, :], hops[:, 1:, :]], axis=-1)
    return frames, F                                  # [B, F, WIN]


def ssl_model_forward(wav, wav_length, params):
    """Equivalent of SSL_Model.forward.

    wav:        [B, 1, T] float32  (PyTorch NCW layout)
    wav_length: [B] int32
    returns:    ssl_features[-1] of shape [B, F, D] (bf16 hidden states)
    """
    # wav = wav.squeeze(1)
    wav = jnp.squeeze(wav, axis=1)  # [B, T]
    B, T = wav.shape

    # Gather-free framing (glue, pure JAX reshape/concat): [B, F, WIN]
    frames, F = _frame_waveform(wav)
    frames = frames.reshape(B * F, WIN).astype(jnp.bfloat16)

    # ssl_lens (computed for parity with backbone signature; not returned,
    # matching the permissive PyTorch wrapper which discards it)
    # TODO(synk): wav_length is not used to mask padded frames (matches the
    # permissive wrapper; a real backbone would mask past each true length).
    _ssl_lens = (wav_length - WIN) // HOP + 1

    # Hot path in Pallas: folded projection+layer1, GELU, layer 2.
    last_hidden = _ssl_backbone_pallas(frames, params)  # [B*F, D] bf16
    return last_hidden.reshape(B, F, SSL_OUT_DIM)


# ----------------------------- main ------------------------------------------
if __name__ == "__main__":
    key = jax.random.PRNGKey(0)
    k_wav, k_param = jax.random.split(key)

    B = 2
    T = 288  # -> F = (288 - 32)//16 + 1 = 17 frames, B*F = 34 rows (ragged tile)
    wav = jax.random.normal(k_wav, (B, 1, T), jnp.float32)
    wav_length = jnp.array([T, T - HOP], dtype=jnp.int32)

    params = init_params(k_param)

    out = ssl_model_forward(wav, wav_length, params)
    out = jax.block_until_ready(out)

    # quick sanity vs. pure-JAX reference (original gather-style framing,
    # same folded weights / bf16-matmul / f32-accumulate numerics)
    wav2 = jnp.squeeze(wav, axis=1)
    F = (T - WIN) // HOP + 1
    starts = jnp.arange(F) * HOP
    idx = starts[:, None] + jnp.arange(WIN)[None, :]
    frames_ref = wav2[:, idx].reshape(B * F, WIN).astype(jnp.bfloat16)
    w_eff, w2, bias_pack = params
    b_eff, b2 = bias_pack[0:1], bias_pack[1:2]
    h1 = jax.nn.gelu(
        jnp.dot(frames_ref, w_eff, preferred_element_type=jnp.float32) + b_eff)
    h2 = jnp.dot(h1.astype(jnp.bfloat16), w2,
                 preferred_element_type=jnp.float32) + b2
    ref = h2.reshape(B, F, SSL_OUT_DIM)

    assert out.shape == (B, F, SSL_OUT_DIM)
    assert jnp.allclose(out.astype(jnp.float32), ref, atol=3e-2, rtol=3e-2)

    print("KERNEL_OK")
</pallas_src>

<mosaic_0001>
module attributes {stable_mosaic.version = 11 : i64} {
  func.func @ssl_kernel(%arg0: i32, %arg1: memref<32x32xbf16, #tpu.memory_space<vmem>>, %arg2: memref<32x128xbf16, #tpu.memory_space<vmem>>, %arg3: memref<128x128xbf16, #tpu.memory_space<vmem>>, %arg4: memref<8x128xf32, #tpu.memory_space<vmem>>, %arg5: memref<32x128xbf16, #tpu.memory_space<vmem>>) attributes {dimension_semantics = [#tpu.dimension_semantics<parallel>], iteration_bounds = array<i64: 2>, scalar_prefetch = 0 : i64, scratch_operands = 0 : i64, tpu.core_type = #tpu.core_type<tc>, window_params = [{transform_indices = @transform_0, window_bounds = array<i64: 32, 32>}, {pipeline_mode = #tpu.pipeline_mode<synchronous>, transform_indices = @transform_1, window_bounds = array<i64: 32, 128>}, {pipeline_mode = #tpu.pipeline_mode<synchronous>, transform_indices = @transform_2, window_bounds = array<i64: 128, 128>}, {pipeline_mode = #tpu.pipeline_mode<synchronous>, transform_indices = @transform_3, window_bounds = array<i64: 8, 128>}, {transform_indices = @transform_4, window_bounds = array<i64: 32, 128>}]} {
    %c0 = arith.constant 0 : index
    %c0_0 = arith.constant 0 : index
    %0 = vector.load %arg4[%c0, %c0_0] : memref<8x128xf32, #tpu.memory_space<vmem>>, vector<8x128xf32>
    %1 = vector.extract_strided_slice %0 {offsets = [0, 0], sizes = [1, 128], strides = [1, 1]} : vector<8x128xf32> to vector<1x128xf32>
    %2 = vector.extract_strided_slice %0 {offsets = [1, 0], sizes = [1, 128], strides = [1, 1]} : vector<8x128xf32> to vector<1x128xf32>
    %c0_1 = arith.constant 0 : index
    %c0_2 = arith.constant 0 : index
    %3 = vector.load %arg1[%c0_1, %c0_2] : memref<32x32xbf16, #tpu.memory_space<vmem>>, vector<32x32xbf16>
    %c0_3 = arith.constant 0 : index
    %c0_4 = arith.constant 0 : index
    %4 = vector.load %arg2[%c0_3, %c0_4] : memref<32x128xbf16, #tpu.memory_space<vmem>>, vector<32x128xbf16>
    %cst = arith.constant dense<0.000000e+00> : vector<32x128xf32>
    %5 = tpu.matmul %3, %4, %cst {dimension_numbers = #tpu.dot_dimension_numbers<[1], [0], [0], [1], [0, 0, 1, 1], [], []>} : vector<32x32xbf16>, vector<32x128xbf16>, vector<32x128xf32> -> vector<32x128xf32>
    %6 = vector.broadcast %1 : vector<1x128xf32> to vector<32x128xf32>
    %7 = arith.addf %5, %6 : vector<32x128xf32>
    %8 = arith.mulf %7, %7 : vector<32x128xf32>
    %9 = arith.mulf %7, %8 : vector<32x128xf32>
    %cst_5 = arith.constant 4.471500e-02 : f32
    %10 = vector.broadcast %cst_5 : f32 to vector<32x128xf32>
    %11 = arith.mulf %10, %9 : vector<32x128xf32>
    %12 = arith.addf %7, %11 : vector<32x128xf32>
    %cst_6 = arith.constant 0.797884583 : f32
    %13 = vector.broadcast %cst_6 : f32 to vector<32x128xf32>
    %14 = arith.mulf %13, %12 : vector<32x128xf32>
    %15 = math.tanh %14 : vector<32x128xf32>
    %cst_7 = arith.constant 1.000000e+00 : f32
    %16 = vector.broadcast %cst_7 : f32 to vector<32x128xf32>
    %17 = arith.addf %16, %15 : vector<32x128xf32>
    %cst_8 = arith.constant 5.000000e-01 : f32
    %18 = vector.broadcast %cst_8 : f32 to vector<32x128xf32>
    %19 = arith.mulf %18, %17 : vector<32x128xf32>
    %20 = arith.mulf %7, %19 : vector<32x128xf32>
    %21 = arith.truncf %20 : vector<32x128xf32> to vector<32x128xbf16>
    %c0_9 = arith.constant 0 : index
    %c0_10 = arith.constant 0 : index
    %22 = vector.load %arg3[%c0_9, %c0_10] : memref<128x128xbf16, #tpu.memory_space<vmem>>, vector<128x128xbf16>
    %cst_11 = arith.constant dense<0.000000e+00> : vector<32x128xf32>
    %23 = tpu.matmul %21, %22, %cst_11 {dimension_numbers = #tpu.dot_dimension_numbers<[1], [0], [0], [1], [0, 0, 1, 1], [], []>} : vector<32x128xbf16>, vector<128x128xbf16>, vector<32x128xf32> -> vector<32x128xf32>
    %24 = vector.broadcast %2 : vector<1x128xf32> to vector<32x128xf32>
    %25 = arith.addf %23, %24 : vector<32x128xf32>
    %26 = arith.truncf %25 : vector<32x128xf32> to vector<32x128xbf16>
    %c0_12 = arith.constant 0 : index
    %c0_13 = arith.constant 0 : index
    %27 = vector.load %arg5[%c0_12, %c0_13] : memref<32x128xbf16, #tpu.memory_space<vmem>>, vector<32x128xbf16>
    tpu.vector_store %arg5[%c0_12, %c0_13], %26 {strides = array<i32>} : memref<32x128xbf16, #tpu.memory_space<vmem>>, vector<32x128xbf16>,
    return
  }
  func.func @transform_0(%arg0: i32) -> (i32, i32) {
    %c0_i32 = arith.constant 0 : i32
    %c0_i32_0 = arith.constant 0 : i32
    return %arg0, %c0_i32 : i32, i32
  }
  func.func @transform_1(%arg0: i32) -> (i32, i32) {
    %c0_i32 = arith.constant 0 : i32
    %c0_i32_0 = arith.constant 0 : i32
    %c0_i32_1 = arith.constant 0 : i32
    return %c0_i32, %c0_i32_0 : i32, i32
  }
  func.func @transform_2(%arg0: i32) -> (i32, i32) {
    %c0_i32 = arith.constant 0 : i32
    %c0_i32_0 = arith.constant 0 : i32
    %c0_i32_1 = arith.constant 0 : i32
    return %c0_i32, %c0_i32_0 : i32, i32
  }
  func.func @transform_3(%arg0: i32) -> (i32, i32) {
    %c0_i32 = arith.constant 0 : i32
    %c0_i32_0 = arith.constant 0 : i32
    %c0_i32_1 = arith.constant 0 : i32
    return %c0_i32, %c0_i32_0 : i32, i32
  }
  func.func @transform_4(%arg0: i32) -> (i32, i32) {
    %c0_i32 = arith.constant 0 : i32
    %c0_i32_0 = arith.constant 0 : i32
    return %arg0, %c0_i32 : i32, i32
  }
}

</mosaic_0001>

<llo_original>
// kernel: tpu_custom_call.1
$region0: #{tpu_custom_call.1}
  #allocation0 [shape = 'u32[]', space=smem, size = 0x4, offset = 0x4, fixed_abs, tag = 'smem constant byte address 0x4 - core index']
  #allocation1 [shape = 'u32[144,128]{1,0:T(1,128)}', space=vmem, size = 0x12000, scoped, tag = 'internal scratch']
  %s0 = inlined_call_operand.vmem [shape: bf16[34,32], index: 0, kind: input, shape index: {}]
  %s1 = inlined_call_operand.vmem [shape: bf16[32,128], index: 1, kind: input, shape index: {}]
  %s2 = inlined_call_operand.hbm [shape: bf16[128,128], index: 2, kind: input, shape index: {}]
  %s3 = inlined_call_operand.vmem [shape: f32[8,128], index: 3, kind: input, shape index: {}]
  %s4 = inlined_call_operand.hbm [shape: bf16[34,128], index: 4, kind: output, shape index: {}]
  %s5 = sld [smem:[#allocation0]]
  $region53: #{tpu_custom_call.1} parent=0
    _
  %s7 = ssub.s32 1, %s5
  %s8 = scalar_select 0, %s7, %s5
  $region1: #{tpu_custom_call.1} parent=0
    #allocation2 [shape = 'u8[32768]{0}', space=vmem, size = 0x8000, scoped, tag = 'input window, operand 2, single buffered']
    #allocation3 [shape = 's32[2]{0}', space=sflag, size = 0x8, scoped, tag = 'scoped memory for tpu_custom_call.1']
    #allocation4 [shape = 's32[2]{0}', space=sflag, size = 0x8, scoped, tag = 'scoped memory for tpu_custom_call.1']
    #allocation5 [shape = 'u8[16384]{0}', space=vmem, size = 0x4000, scoped, tag = 'output window, operand 0']
    %9 = vsyncpa [#allocation3], 0
    %10 = vsyncpa [#allocation4], 0
    %s11 = scalar_lea.sflag [#allocation4], 1
    %12 = vsyncpa %s11, 0
    loop: start=0, step=1, limit=4
    $region2: #{tpu_custom_call.1} parent=1 // loop_pre_header
      _
    $region3: #{tpu_custom_call.1} parent=1 // loop_header
      %s14 = sphi 0, %s18
      %p15 = scmp.ge.s32.totalorder %s14, 4
      %s24 = sphi 0, %s26
      %s27 = sphi 0, %s24
      %s28 = sphi 0, %s27
      %s44 = sphi 0, %s28
      %s48 = sphi 0, %s48
      %s50 = sphi 0, %s48
      %s51 = sphi 0, %s50
      %s65 = sphi 0, %s51
      %s69 = sphi 0, %s69
      %s71 = sphi 0, %s69
      %s72 = sphi 0, %s71
      %s86 = sphi 0, %s72
      %s90 = sphi 0, %s90
      %s92 = sphi 0, %s90
      %s93 = sphi 0, %s92
      %s107 = sphi 0, %s93
      %s113 = sphi 0, %s115
      %s116 = sphi 0, %s113
      %s117 = sphi 0, %s116
      %s133 = sphi 0, %s117
    $region4: #{tpu_custom_call.1} parent=1 // loop_header_branch
      %17 = sbr.rel (%p15) target = $region8
    $region5: #{tpu_custom_call.1} parent=1 // loop_body
      %s19 = ssub.s32 %s14, 1
      %s20 = ssub.s32 %s14, 2
      %s21 = sadd.s32 %s14, 1
      %s22 = ssub.s32 %s14, %s21
      %p23 = scmp.eq.s32.totalorder %s22, 0
      %s25 = sadd.s32 %s24, 1
      %s26 = scalar_select %p23, %s24, %s25
      %p29 = pneg %p23
      %p30 = scmp.eq.s32.totalorder %s14, 1
      %p31 = por %p29, %p30
      %p32 = scmp.ne.s32.totalorder %s24, %s27
      %p33 = scmp.eq.s32.totalorder %s14, 0
      %p34 = por %p32, %p33
      %p35 = scmp.ne.s32.totalorder %s24, %s27
      %p36 = scmp.eq.s32.totalorder %s19, 1
      %p37 = por %p35, %p36
      %p38 = scmp.ne.s32.totalorder %s27, %s28
      %p39 = scmp.eq.s32.totalorder %s19, 0
      %p40 = por %p38, %p39
      %p41 = scmp.ne.s32.totalorder %s27, %s28
      %p42 = scmp.eq.s32.totalorder %s20, 1
      %p43 = por %p41, %p42
      %p45 = scmp.ne.s32.totalorder %s28, %s44
      %p46 = scmp.eq.s32.totalorder %s20, 0
      %p47 = por %p45, %p46
      %s49 = sadd.s32 %s48, 1
      %p52 = scmp.eq.s32.totalorder %s14, 1
      %p53 = scmp.ne.s32.totalorder %s48, %s50
      %p54 = scmp.eq.s32.totalorder %s14, 0
      %p55 = por %p53, %p54
      %p56 = scmp.ne.s32.totalorder %s48, %s50
      %p57 = scmp.eq.s32.totalorder %s19, 1
      %p58 = por %p56, %p57
      %p59 = scmp.ne.s32.totalorder %s50, %s51
      %p60 = scmp.eq.s32.totalorder %s19, 0
      %p61 = por %p59, %p60
      %p62 = scmp.ne.s32.totalorder %s50, %s51
      %p63 = scmp.eq.s32.totalorder %s20, 1
      %p64 = por %p62, %p63
      %p66 = scmp.ne.s32.totalorder %s51, %s65
      %p67 = scmp.eq.s32.totalorder %s20, 0
      %p68 = por %p66, %p67
      %s70 = sadd.s32 %s69, 1
      %p73 = scmp.eq.s32.totalorder %s14, 1
      %p74 = scmp.ne.s32.totalorder %s69, %s71
      %p75 = scmp.eq.s32.totalorder %s14, 0
      %p76 = por %p74, %p75
      %p77 = scmp.ne.s32.totalorder %s69, %s71
      %p78 = scmp.eq.s32.totalorder %s19, 1
      %p79 = por %p77, %p78
      %p80 = scmp.ne.s32.totalorder %s71, %s72
      %p81 = scmp.eq.s32.totalorder %s19, 0
      %p82 = por %p80, %p81
      %p83 = scmp.ne.s32.totalorder %s71, %s72
      %p84 = scmp.eq.s32.totalorder %s20, 1
      %p85 = por %p83, %p84
      %p87 = scmp.ne.s32.totalorder %s72, %s86
      %p88 = scmp.eq.s32.totalorder %s20, 0
      %p89 = por %p87, %p88
      %s91 = sadd.s32 %s90, 1
      %p94 = scmp.eq.s32.totalorder %s14, 1
      %p95 = scmp.ne.s32.totalorder %s90, %s92
      %p96 = scmp.eq.s32.totalorder %s14, 0
      %p97 = por %p95, %p96
      %p98 = scmp.ne.s32.totalorder %s90, %s92
      %p99 = scmp.eq.s32.totalorder %s19, 1
      %p100 = por %p98, %p99
      %p101 = scmp.ne.s32.totalorder %s92, %s93
      %p102 = scmp.eq.s32.totalorder %s19, 0
      %p103 = por %p101, %p102
      %p104 = scmp.ne.s32.totalorder %s92, %s93
      %p105 = scmp.eq.s32.totalorder %s20, 1
      %p106 = por %p104, %p105
      %p108 = scmp.ne.s32.totalorder %s93, %s107
      %p109 = scmp.eq.s32.totalorder %s20, 0
      %p110 = por %p108, %p109
      %s111 = ssub.s32 %s14, %s21
      %p112 = scmp.eq.s32.totalorder %s111, 0
      %s114 = sadd.s32 %s113, 1
      %s115 = scalar_select %p112, %s113, %s114
      %p118 = pneg %p112
      %p119 = scmp.eq.s32.totalorder %s14, 1
      %p120 = por %p118, %p119
      %p121 = scmp.ne.s32.totalorder %s113, %s116
      %p122 = scmp.eq.s32.totalorder %s14, 0
      %p123 = por %p121, %p122
      %p124 = scmp.ne.s32.totalorder %s113, %s116
      %p125 = scmp.eq.s32.totalorder %s19, 1
      %p126 = por %p124, %p125
      %p127 = scmp.ne.s32.totalorder %s116, %s117
      %p128 = scmp.eq.s32.totalorder %s19, 0
      %p129 = por %p127, %p128
      %p130 = scmp.ne.s32.totalorder %s116, %s117
      %p131 = scmp.eq.s32.totalorder %s20, 1
      %p132 = por %p130, %p131
      %p134 = scmp.ne.s32.totalorder %s117, %s133
      %p135 = scmp.eq.s32.totalorder %s20, 0
      %p136 = por %p134, %p135
      %p137 = scmp.le.s32.totalorder 1, %s14
      %p138 = scmp.lt.s32.totalorder %s14, 3
      %p139 = pnand %p137, %p138
      %p140 = pneg %p139
      // Predicated region
      $region9: #{tpu_custom_call.1} parent=5 // pred_check
        _
      $region10: #{tpu_custom_call.1} parent=5 // pred_check_branch
        %142 = sbr.rel (%p139) target = $region12
      $region11: #{tpu_custom_call.1} parent=5 // pred_region
        %s143 = ssub.s32 %s14, 1
        // Predicated region
        $region13: #{tpu_custom_call.1} parent=11 // pred_check
          %p144 = pneg %p61
        $region14: #{tpu_custom_call.1} parent=11 // pred_check_branch
          %146 = sbr.rel (%p144) target = $region16
        $region15: #{tpu_custom_call.1} parent=11 // pred_region
          _
        $region16: #{tpu_custom_call.1} parent=11 // pred_fallthru
          _
        // Predicated region
        $region17: #{tpu_custom_call.1} parent=11 // pred_check
          %p147 = pneg %p82
        $region18: #{tpu_custom_call.1} parent=11 // pred_check_branch
          %149 = sbr.rel (%p147) target = $region20
        $region19: #{tpu_custom_call.1} parent=11 // pred_region
          %s151 = ssub.s32 1024, 1024
          %152 = vsyncadd [#allocation3], %s151
          %s153 = sshll.u32 [#allocation2], 4
          %s154 = int_to_ptr.vmem [resolvable:$true] %s153
          %159 = dma.hbm_to_vmem [thread:$0]  %s2, 1024, %s154, [#allocation3], 64, 64, 4
        $region20: #{tpu_custom_call.1} parent=11 // pred_fallthru
          _
        // Predicated region
        $region21: #{tpu_custom_call.1} parent=11 // pred_check
          %p160 = pneg %p103
        $region22: #{tpu_custom_call.1} parent=11 // pred_check_branch
          %162 = sbr.rel (%p160) target = $region24
        $region23: #{tpu_custom_call.1} parent=11 // pred_region
          _
        $region24: #{tpu_custom_call.1} parent=11 // pred_fallthru
          _
      $region12: #{tpu_custom_call.1} parent=5 // pred_fallthru
        _
      %p163 = scmp.lt.s32.totalorder %s14, 2
      // Predicated region
      $region25: #{tpu_custom_call.1} parent=5 // pred_check
        %p164 = pneg %p163
      $region26: #{tpu_custom_call.1} parent=5 // pred_check_branch
        %166 = sbr.rel (%p164) target = $region28
      $region27: #{tpu_custom_call.1} parent=5 // pred_region
        // Predicated region
        $region29: #{tpu_custom_call.1} parent=27 // pred_check
          %p167 = pneg %p34
        $region30: #{tpu_custom_call.1} parent=27 // pred_check_branch
          %169 = sbr.rel (%p167) target = $region32
        $region31: #{tpu_custom_call.1} parent=27 // pred_region
          %s170 = smul.u32 4, %s14
          %s171 = ssub.s32 5, %s170
          %p172 = scmp.lt.s32.totalorder %s171, 4
          %s173 = scalar_select %p172, %s171, 4
          %s174 = smul.u32 64, %s173
          %p175 = scmp.lt.s32.totalorder %s170, 4
          %s176 = scalar_select %p175, %s170, 4
          %s177 = smul.addr %s176, 4
          %s178 = scalar_lea.vmem %s0, %s177
          %s179 = smul.u32 4, %s14
          %s180 = ssub.s32 5, %s179
          %p181 = scmp.lt.s32.totalorder %s180, 4
          %s182 = scalar_select %p181, %s180, 4
          %s183 = smul.u32 64, %s182
        $region32: #{tpu_custom_call.1} parent=27 // pred_fallthru
          _
      $region28: #{tpu_custom_call.1} parent=5 // pred_fallthru
        _
      %p184 = scmp.le.s32.totalorder 1, %s14
      %p185 = scmp.lt.s32.totalorder %s14, 3
      %p186 = pnand %p184, %p185
      %p187 = pneg %p186
      // Predicated region
      $region33: #{tpu_custom_call.1} parent=5 // pred_check
        _
      $region34: #{tpu_custom_call.1} parent=5 // pred_check_branch
        %189 = sbr.rel (%p186) target = $region36
      $region35: #{tpu_custom_call.1} parent=5 // pred_region
        %s190 = ssub.s32 %s14, 1
        // Predicated region
        $region37: #{tpu_custom_call.1} parent=35 // pred_check
          %p191 = pneg %p82
        $region38: #{tpu_custom_call.1} parent=35 // pred_check_branch
          %193 = sbr.rel (%p191) target = $region40
        $region39: #{tpu_custom_call.1} parent=35 // pred_region
          %194 = dma.done [#allocation3], 1024
        $region40: #{tpu_custom_call.1} parent=35 // pred_fallthru
          _
        %s195 = smul.u32 4, %s19
        %s196 = ssub.s32 5, %s195
        %p197 = scmp.lt.s32.totalorder %s196, 4
        %s198 = scalar_select %p197, %s196, 4
        %s199 = smul.u32 64, %s198
        %p200 = scmp.lt.s32.totalorder %s195, 4
        %s201 = scalar_select %p200, %s195, 4
        %s202 = smul.addr %s201, 4
        %s203 = scalar_lea.vmem %s0, %s202
        %p204 = pneg %p40
        %p205 = pneg %p37
        %p206 = pneg %p61
        %p207 = pneg %p58
        %p208 = pneg %p82
        %p209 = pneg %p79
        %p210 = pneg %p103
        %p211 = pneg %p100
        %p212 = pneg %p129
        %p213 = pneg %p126
        %s214 = sand.u32 %s116, 1
        %s215 = scalar_lea.sflag [#allocation4], %s214
        %s216 = sand.u32 %s116, 1
        %s217 = smul.addr %s216, 16
        %s218 = scalar_lea.vmem [#allocation5], %s217
        %s219 = smul.u32 4, %s19
        %s220 = ssub.s32 5, %s219
        %p221 = scmp.lt.s32.totalorder %s220, 4
        %s222 = scalar_select %p221, %s220, 4
        %s223 = smul.u32 64, %s222
        %p224 = scmp.lt.s32.totalorder %s219, 4
        %s225 = scalar_select %p224, %s219, 4
        %s226 = smul.addr %s225, 4
        %s227 = scalar_lea.vmem %s0, %s226
        %s228 = smul.u32 4, %s19
        %s229 = ssub.s32 5, %s228
        %p230 = scmp.lt.s32.totalorder %s229, 4
        %s231 = scalar_select %p230, %s229, 4
        %s232 = smul.u32 64, %s231
        %s233 = smul.u32 4, %s19
        %s234 = ssub.s32 5, %s233
        %p235 = scmp.lt.s32.totalorder %s234, 4
        %s236 = scalar_select %p235, %s234, 4
        %s237 = smul.u32 64, %s236
        %v239 = vld [vmem:[%s3] sm:$0xff]
        %v240 = vld [vmem:[%s227] sm:$0xf]
        %v241 = vld [vmem:[%s227 + $0x4] sm:$0xf]
        %v242 = vld [vmem:[%s227 + $0x8] sm:$0xf]
        %v243 = vld [vmem:[%s227 + $0xc] sm:$0xf]
        %v244 = vld [vmem:[%s1] sm:$0xf]
        %v245 = vld [vmem:[%s1 + $0x4] sm:$0xf]
        %v246 = vld [vmem:[%s1 + $0x8] sm:$0xf]
        %v247 = vld [vmem:[%s1 + $0xc] sm:$0xf]
        %v248 = vlaneseq
        %v249 = vshrl.u32 %v248, 7
        %v250 = vsub.s32 0, %v249
        %v251 = vrot.slane %v239, %v250
        %v256 = vunpack.c.l.b16 %v240
        %v257 = vunpack.c.l.b16 %v241
        %v258 = vunpack.c.l.b16 %v242
        %v259 = vunpack.c.l.b16 %v243
        %v260 = vpack.c.b16 %v257, %v256
        %v261 = vpack.c.b16 %v259, %v258
        %v266 = vunpack.c.l.b16 %v244
        %v267 = vunpack.c.l.b16 %v245
        %v268 = vunpack.c.l.b16 %v246
        %v269 = vunpack.c.l.b16 %v247
        %v270 = vpack.c.b16 %v267, %v266
        %v271 = vpack.c.b16 %v269, %v268
        %vm274 = vcmask 261120
        %v276 = vsel %vm274, %v260, 0
        %v279 = vsel %vm274, %v261, 0
        %281 = vmatprep.subr.bf16.mxu0 0
        %282 = vmatpush1.bf16.msra.mxu0 %v270
        %283 = vmatprep.subr.bf16.mxu0 0
        %284 = vmatpush1.bf16.msra.mxu0 %v271
        %285 = vmatprep.subr.bf16.mxu0 0
        %286 = vmatpush1.bf16.msra.mxu0 0
        %287 = vmatprep.subr.bf16.mxu0 0
        %288 = vmatpush1.bf16.msra.mxu0 0
        %289 = vmatprep.subr.bf16.mxu0 0
        %290 = vmatpush1.bf16.msra.mxu0 0
        %291 = vmatprep.subr.bf16.mxu0 0
        %292 = vmatpush1.bf16.msra.mxu0 0
        %293 = vmatprep.subr.bf16.mxu0 0
        %294 = vmatpush1.bf16.msra.mxu0 0
        %295 = vmatprep.subr.bf16.mxu0 0
        %296 = vmatpush1.bf16.msra.mxu0 0
        %297 = vmatprep.subr.bf16.mxu0 0
        %298 = vmatpush1.bf16.msra.mxu0 0
        %299 = vmatprep.subr.bf16.mxu0 0
        %300 = vmatpush1.bf16.msra.mxu0 0
        %301 = vmatprep.subr.bf16.mxu0 0
        %302 = vmatpush1.bf16.msra.mxu0 0
        %303 = vmatprep.subr.bf16.mxu0 0
        %304 = vmatpush1.bf16.msra.mxu0 0
        %305 = vmatprep.subr.bf16.mxu0 0
        %306 = vmatpush1.bf16.msra.mxu0 0
        %307 = vmatprep.subr.bf16.mxu0 0
        %308 = vmatpush1.bf16.msra.mxu0 0
        %309 = vmatprep.subr.bf16.mxu0 0
        %310 = vmatpush1.bf16.msra.mxu0 0
        %311 = vmatprep.subr.bf16.mxu0 0
        %312 = vmatpush1.bf16.msra.mxu0 0
        %313 = vmatprep.mubr.bf16.mxu0 0
        %314 = vmatmul.mubr.bf16.gmra.mrb[0].mxu0 %v276
        %v315 = vpop.f32.mrb[0].mxu0
        %v316 = vadd.f32 %v251, %v315
        %v317 = vpop.f32.mrb[0].mxu0
        %v318 = vpop.f32.mrb[0].mxu0
        %v319 = vadd.f32 %v251, %v318
        %v320 = vpop.f32.mrb[0].mxu0
        %321 = vmatprep.mubr.bf16.mxu0 0
        %322 = vmatmul.mubr.bf16.gmra.mrb[0].mxu0 %v279
        %v323 = vpop.f32.mrb[0].mxu0
        %v324 = vadd.f32 %v251, %v323
        %v325 = vpop.f32.mrb[0].mxu0
        %v326 = vpop.f32.mrb[0].mxu0
        %v327 = vadd.f32 %v251, %v326
        %v328 = vpop.f32.mrb[0].mxu0
        %329 = vdwg.mxu0
        %v330 = vmul.f32 %v316, %v316
        %v331 = vmul.f32 %v319, %v319
        %v332 = vmul.f32 %v324, %v324
        %v333 = vmul.f32 %v327, %v327
        %v334 = vmul.f32 %v316, %v330
        %v335 = vmul.f32 %v319, %v331
        %v336 = vmul.f32 %v324, %v332
        %v337 = vmul.f32 %v327, %v333
        %v338 = vmul.f32 %v334, 0.044715
        %v339 = vmul.f32 %v335, 0.044715
        %v340 = vmul.f32 %v336, 0.044715
        %v341 = vmul.f32 %v337, 0.044715
        %v342 = vadd.f32 %v316, %v338
        %v343 = vadd.f32 %v319, %v339
        %v344 = vadd.f32 %v324, %v340
        %v345 = vadd.f32 %v327, %v341
        %v346 = vmul.f32 %v342, 0.7978846
        %v347 = vmul.f32 %v343, 0.7978846
        %v348 = vmul.f32 %v344, 0.7978846
        %v349 = vmul.f32 %v345, 0.7978846
        %v350 = vtanh.pop %v346
        %v351 = vtanh.pop %v347
        %v352 = vtanh.pop %v348
        %v353 = vtanh.pop %v349
        %v354 = vadd.f32 %v350, 1.0
        %v355 = vadd.f32 %v351, 1.0
        %v356 = vadd.f32 %v352, 1.0
        %v357 = vadd.f32 %v353, 1.0
        %v358 = vmul.f32 %v354, 0.5
        %v359 = vmul.f32 %v355, 0.5
        %v360 = vmul.f32 %v356, 0.5
        %v361 = vmul.f32 %v357, 0.5
        %v362 = vmul.f32 %v316, %v358
        %v363 = vmul.f32 %v319, %v359
        %v364 = vmul.f32 %v324, %v360
        %v365 = vmul.f32 %v327, %v361
        %v366 = vpack.c.bf16 %v363, %v362
        %v367 = vpack.c.bf16 %v365, %v364
        %v368 = vld [vmem:[#allocation2] sm:$0xf]
        %v369 = vld [vmem:[#allocation2 + $0x4] sm:$0xf]
        %v370 = vld [vmem:[#allocation2 + $0x8] sm:$0xf]
        %v371 = vld [vmem:[#allocation2 + $0xc] sm:$0xf]
        %v372 = vld [vmem:[#allocation2 + $0x10] sm:$0xf]
        %v373 = vld [vmem:[#allocation2 + $0x14] sm:$0xf]
        %v374 = vld [vmem:[#allocation2 + $0x18] sm:$0xf]
        %v375 = vld [vmem:[#allocation2 + $0x1c] sm:$0xf]
        %v376 = vld [vmem:[#allocation2 + $0x20] sm:$0xf]
        %v377 = vld [vmem:[#allocation2 + $0x24] sm:$0xf]
        %v378 = vld [vmem:[#allocation2 + $0x28] sm:$0xf]
        %v379 = vld [vmem:[#allocation2 + $0x2c] sm:$0xf]
        %v380 = vld [vmem:[#allocation2 + $0x30] sm:$0xf]
        %v381 = vld [vmem:[#allocation2 + $0x34] sm:$0xf]
        %v382 = vld [vmem:[#allocation2 + $0x38] sm:$0xf]
        %v383 = vld [vmem:[#allocation2 + $0x3c] sm:$0xf]
        %v384 = vlaneseq
        %v385 = vshrl.u32 %v384, 7
        %v386 = vsub.s32 1, %v385
        %v387 = vrot.slane %v239, %v386
        %v404 = vunpack.c.l.b16 %v368
        %v405 = vunpack.c.l.b16 %v369
        %v406 = vunpack.c.l.b16 %v370
        %v407 = vunpack.c.l.b16 %v371
        %v408 = vunpack.c.l.b16 %v372
        %v409 = vunpack.c.l.b16 %v373
        %v410 = vunpack.c.l.b16 %v374
        %v411 = vunpack.c.l.b16 %v375
        %v412 = vunpack.c.l.b16 %v376
        %v413 = vunpack.c.l.b16 %v377
        %v414 = vunpack.c.l.b16 %v378
        %v415 = vunpack.c.l.b16 %v379
        %v416 = vunpack.c.l.b16 %v380
        %v417 = vunpack.c.l.b16 %v381
        %v418 = vunpack.c.l.b16 %v382
        %v419 = vunpack.c.l.b16 %v383
        %v420 = vpack.c.b16 %v405, %v404
        %v421 = vpack.c.b16 %v407, %v406
        %v422 = vpack.c.b16 %v409, %v408
        %v423 = vpack.c.b16 %v411, %v410
        %v424 = vpack.c.b16 %v413, %v412
        %v425 = vpack.c.b16 %v415, %v414
        %v426 = vpack.c.b16 %v417, %v416
        %v427 = vpack.c.b16 %v419, %v418
        %436 = vmatprep.subr.bf16.mxu0 0
        %437 = vmatpush1.bf16.msra.mxu0 %v420
        %438 = vmatprep.subr.bf16.mxu0 0
        %439 = vmatpush1.bf16.msra.mxu0 %v421
        %440 = vmatprep.subr.bf16.mxu0 0
        %441 = vmatpush1.bf16.msra.mxu0 %v422
        %442 = vmatprep.subr.bf16.mxu0 0
        %443 = vmatpush1.bf16.msra.mxu0 %v423
        %444 = vmatprep.subr.bf16.mxu0 0
        %445 = vmatpush1.bf16.msra.mxu0 %v424
        %446 = vmatprep.subr.bf16.mxu0 0
        %447 = vmatpush1.bf16.msra.mxu0 %v425
        %448 = vmatprep.subr.bf16.mxu0 0
        %449 = vmatpush1.bf16.msra.mxu0 %v426
        %450 = vmatprep.subr.bf16.mxu0 0
        %451 = vmatpush1.bf16.msra.mxu0 %v427
        %452 = vmatprep.subr.bf16.mxu0 0
        %453 = vmatpush1.bf16.msra.mxu0 0
        %454 = vmatprep.subr.bf16.mxu0 0
        %455 = vmatpush1.bf16.msra.mxu0 0
        %456 = vmatprep.subr.bf16.mxu0 0
        %457 = vmatpush1.bf16.msra.mxu0 0
        %458 = vmatprep.subr.bf16.mxu0 0
        %459 = vmatpush1.bf16.msra.mxu0 0
        %460 = vmatprep.subr.bf16.mxu0 0
        %461 = vmatpush1.bf16.msra.mxu0 0
        %462 = vmatprep.subr.bf16.mxu0 0
        %463 = vmatpush1.bf16.msra.mxu0 0
        %464 = vmatprep.subr.bf16.mxu0 0
        %465 = vmatpush1.bf16.msra.mxu0 0
        %466 = vmatprep.subr.bf16.mxu0 0
        %467 = vmatpush1.bf16.msra.mxu0 0
        %468 = vmatprep.mubr.bf16.mxu0 0
        %469 = vmatmul.mubr.bf16.gmra.mrb[0].mxu0 %v366
        %v470 = vpop.f32.mrb[0].mxu0
        %v471 = vadd.f32 %v387, %v470
        %v472 = vpop.f32.mrb[0].mxu0
        %v473 = vpop.f32.mrb[0].mxu0
        %v474 = vadd.f32 %v387, %v473
        %v475 = vpop.f32.mrb[0].mxu0
        %476 = vmatprep.mubr.bf16.mxu0 0
        %477 = vmatmul.mubr.bf16.gmra.mrb[0].mxu0 %v367
        %v478 = vpop.f32.mrb[0].mxu0
        %v479 = vadd.f32 %v387, %v478
        %v480 = vpop.f32.mrb[0].mxu0
        %v481 = vpop.f32.mrb[0].mxu0
        %v482 = vadd.f32 %v387, %v481
        %v483 = vpop.f32.mrb[0].mxu0
        %484 = vdwg.mxu0
        %v485 = vpack.c.bf16 %v474, %v471
        %v486 = vpack.c.bf16 %v482, %v479
        %v489 = vunpack.c.l.b16 %v485
        %v490 = vunpack.c.h.b16 %v485
        %v491 = vunpack.c.l.b16 %v486
        %v492 = vunpack.c.h.b16 %v486
        %v493 = vpack.c.b16 %v489, %v489
        %v494 = vpack.c.b16 %v490, %v490
        %v495 = vpack.c.b16 %v491, %v491
        %v496 = vpack.c.b16 %v492, %v492
        %501 = vst [vmem:[%s218] sm:$0xf] %v493
        %502 = vst [vmem:[%s218 + $0x4] sm:$0xf] %v494
        %503 = vst [vmem:[%s218 + $0x8] sm:$0xf] %v495
        %504 = vst [vmem:[%s218 + $0xc] sm:$0xf] %v496
        %s505 = sand.u32 %s116, 1
        %s506 = scalar_lea.sflag [#allocation4], %s505
        %s507 = sand.u32 %s116, 1
        %s508 = smul.addr %s507, 16
        %s509 = scalar_lea.vmem [#allocation5], %s508
        // Predicated region
        $region41: #{tpu_custom_call.1} parent=35 // pred_check
          %p510 = pneg %p126
        $region42: #{tpu_custom_call.1} parent=35 // pred_check_branch
          %512 = sbr.rel (%p510) target = $region44
        $region43: #{tpu_custom_call.1} parent=35 // pred_region
          %s513 = smul.u32 4, %s19
          %s514 = ssub.s32 5, %s513
          %p515 = scmp.lt.s32.totalorder %s514, 4
          %s516 = scalar_select %p515, %s514, 4
          %s517 = smul.u32 64, %s516
          %s519 = ssub.s32 256, %s517
          %520 = vsyncadd %s506, %s519
          %p521 = scmp.ne.s32.totalorder 0, %s517
          %s522 = smul.addr %s513, 64
          %s523 = scalar_lea.hbm %s4, %s522
          %s524 = smul.u32 4, %s516
          %s525 = sshll.u32 %s509, 4
          %s526 = int_to_ptr.vmem [resolvable:$true] %s525
          %s527 = sshll.u32 %s524, 4
          %531 = dma.vmem_to_hbm [thread:$0]  (%p521), %s526, %s527, %s523, %s506, 64, 64, 4
        $region44: #{tpu_custom_call.1} parent=35 // pred_fallthru
          _
      $region36: #{tpu_custom_call.1} parent=5 // pred_fallthru
        _
      %p532 = scmp.le.s32.totalorder 2, %s14
      // Predicated region
      $region45: #{tpu_custom_call.1} parent=5 // pred_check
        %p533 = pneg %p532
      $region46: #{tpu_custom_call.1} parent=5 // pred_check_branch
        %535 = sbr.rel (%p533) target = $region48
      $region47: #{tpu_custom_call.1} parent=5 // pred_region
        %s536 = ssub.s32 %s14, 2
        // Predicated region
        $region49: #{tpu_custom_call.1} parent=47 // pred_check
          %p537 = pneg %p132
        $region50: #{tpu_custom_call.1} parent=47 // pred_check_branch
          %539 = sbr.rel (%p537) target = $region52
        $region51: #{tpu_custom_call.1} parent=47 // pred_region
          %s540 = sand.u32 %s117, 1
          %s541 = scalar_lea.sflag [#allocation4], %s540
          %s542 = sand.u32 %s117, 1
          %s543 = smul.addr %s542, 16
          %s544 = scalar_lea.vmem [#allocation5], %s543
          %545 = dma.done %s541, 256
        $region52: #{tpu_custom_call.1} parent=47 // pred_fallthru
          _
      $region48: #{tpu_custom_call.1} parent=5 // pred_fallthru
        _
    $region6: #{tpu_custom_call.1} parent=1 // loop_footer
      %s18 = sadd.s32 1, %s14
    $region7: #{tpu_custom_call.1} parent=1 // loop_footer_branch
      %13 = sbr.rel target = $region3
    $region8: #{tpu_custom_call.1} parent=1 // loop_exit
      _
    %546 = vsyncpa [#allocation3], 1
    %s547 = scalar_lea.sflag [#allocation3], 1
    %548 = vsyncpa %s547, 1
    %549 = vsyncpa [#allocation4], 1
    %s550 = scalar_lea.sflag [#allocation4], 1
    %551 = vsyncpa %s550, 1

</llo_original>
